<compile_context>
chip_gen: v5e
topology: v5e:2x2
jax: 0.10.0
libtpu: 0.0.40
codegen_flags: <defaults>
</compile_context>

<pallas_src>
import jax
import jax.numpy as jnp
from jax.experimental import pallas as pl
from jax.experimental.pallas import tpu as pltpu


def _round_up(x: int, m: int) -> int:
    return ((x + m - 1) // m) * m


def _pad2d(a, rows: int, cols: int):
    r, c = a.shape
    if r == rows and c == cols:
        return a
    return jnp.pad(a, ((0, rows - r), (0, cols - c)))


# ------------------------- kernels -------------------------

def _dimred_fwd_kernel(x_ref, compT_ref, mproj_ref, o_ref, acc_ref):
    # acc += x_tile @ compT_tile  (f32 accumulation over the D grid axis)
    k = pl.program_id(1)

    @pl.when(k == 0)
    def _():
        acc_ref[...] = jnp.zeros_like(acc_ref)

    acc_ref[...] += jnp.dot(
        x_ref[...], compT_ref[...], preferred_element_type=jnp.float32
    )

    @pl.when(k == pl.num_programs(1) - 1)
    def _():
        # (x - mean) @ comp.T == x @ comp.T - (mean @ comp.T)
        o_ref[...] = (acc_ref[...] - mproj_ref[...]).astype(o_ref.dtype)


def _dimred_inv_kernel(z_ref, comp_ref, mean_ref, o_ref):
    # o = z @ comp + mean   (full-K contraction per tile; K is small)
    o_ref[...] = (
        jnp.dot(z_ref[...], comp_ref[...], preferred_element_type=jnp.float32)
        + mean_ref[...]
    ).astype(o_ref.dtype)


# ------------------------- pallas_call wrappers -------------------------

def _forward_call(x_pad, compT_pad, mproj_pad, tb, td):
    b_pad, d_pad = x_pad.shape
    _, k_pad = compT_pad.shape
    grid = (b_pad // tb, d_pad // td)
    return pl.pallas_call(
        _dimred_fwd_kernel,
        out_shape=jax.ShapeDtypeStruct((b_pad, k_pad), x_pad.dtype),
        grid_spec=pltpu.PrefetchScalarGridSpec(
            num_scalar_prefetch=0,
            grid=grid,
            in_specs=[
                pl.BlockSpec((tb, td), lambda i, k: (i, k)),        # x tile
                pl.BlockSpec((td, k_pad), lambda i, k: (k, 0)),     # comp.T tile
                pl.BlockSpec((1, k_pad), lambda i, k: (0, 0)),      # mean_proj
            ],
            out_specs=pl.BlockSpec((tb, k_pad), lambda i, k: (i, 0)),
            scratch_shapes=[pltpu.VMEM((tb, k_pad), jnp.float32)],
        ),
        compiler_params=pltpu.CompilerParams(
            dimension_semantics=("parallel", "arbitrary"),
        ),
    )(x_pad, compT_pad, mproj_pad)


def _invert_call(z_pad, comp_pad, mean_pad, tb, tn):
    b_pad, k_pad = z_pad.shape
    _, d_pad = comp_pad.shape
    grid = (b_pad // tb, d_pad // tn)
    return pl.pallas_call(
        _dimred_inv_kernel,
        out_shape=jax.ShapeDtypeStruct((b_pad, d_pad), z_pad.dtype),
        grid_spec=pltpu.PrefetchScalarGridSpec(
            num_scalar_prefetch=0,
            grid=grid,
            in_specs=[
                pl.BlockSpec((tb, k_pad), lambda i, j: (i, 0)),     # z tile
                pl.BlockSpec((k_pad, tn), lambda i, j: (0, j)),     # comp tile
                pl.BlockSpec((1, tn), lambda i, j: (0, j)),         # mean tile
            ],
            out_specs=pl.BlockSpec((tb, tn), lambda i, j: (i, j)),
        ),
        compiler_params=pltpu.CompilerParams(
            dimension_semantics=("parallel", "parallel"),
        ),
    )(z_pad, comp_pad, mean_pad)


# ------------------------- module -------------------------

class DimredWrapper:
    """JAX/Pallas equivalent of the PyTorch DimredWrapper: passthrough to a
    PCA-style dimred module whose forward/invert hot paths are Pallas kernels."""

    def __init__(self, components, mean, *, block_b=256, block_d=512):
        K, D = components.shape
        self.K, self.D = K, D

        # Tile sizes: batch tile multiple of 8, feature tile multiple of 128.
        self.block_b = max(8, _round_up(block_b, 8))
        td = max(128, _round_up(min(block_d, _round_up(D, 128)), 128))
        self.td = td
        self.tn = td                      # invert output-D tile

        self.k_pad = _round_up(K, 128)    # lane-dense forward output
        self.d_pad = _round_up(D, td)

        comp = components
        mean2d = mean.reshape(1, D)

        # One-time parameter preprocessing (outside the kernels).
        self.comp_pad = _pad2d(comp, self.k_pad, self.d_pad)          # [Kp, Dp]
        self.compT_pad = jnp.transpose(self.comp_pad)                 # [Dp, Kp]
        self.mean_pad = _pad2d(mean2d, 1, self.d_pad)                 # [1, Dp]
        mproj = mean2d @ comp.T                                       # [1, K]
        self.mproj_pad = _pad2d(mproj, 1, self.k_pad)                 # [1, Kp]

    def _batch_tile(self, B):
        tb = min(self.block_b, _round_up(B, 8))
        return tb, _round_up(B, tb)

    def forward(self, x):
        B, D = x.shape
        assert D == self.D
        tb, b_pad = self._batch_tile(B)
        x_pad = _pad2d(x, b_pad, self.d_pad)
        out = _forward_call(x_pad, self.compT_pad, self.mproj_pad, tb, self.td)
        return out[:B, : self.K]

    def invert(self, z):
        B, K = z.shape
        assert K == self.K
        tb, b_pad = self._batch_tile(B)
        z_pad = _pad2d(z, b_pad, self.k_pad)
        out = _invert_call(z_pad, self.comp_pad, self.mean_pad, tb, self.tn)
        return out[:B, : self.D]


# ------------------------- demo -------------------------

if __name__ == "__main__":
    key = jax.random.PRNGKey(0)
    k1, k2, k3 = jax.random.split(key, 3)

    B, D, K = 24, 256, 16  # batch, feature dim, reduced dim

    components = jax.random.normal(k1, (K, D), dtype=jnp.float32) * 0.1
    mean = jax.random.normal(k2, (D,), dtype=jnp.float32) * 0.05
    x = jax.random.normal(k3, (B, D), dtype=jnp.float32)

    # Small tiles so the demo actually exercises multi-step grids:
    # forward grid = (3 batch tiles, 2 D tiles), invert grid = (3, 2).
    wrapper = DimredWrapper(components, mean, block_b=8, block_d=128)

    # forward (DimredWrapper.forward -> dimred_module.forward)
    z = jax.block_until_ready(wrapper.forward(x))

    # invert (DimredWrapper.invert -> dimred_module.invert)
    x_rec = jax.block_until_ready(wrapper.invert(z))

    # reference check
    z_ref = (x - mean[None, :]) @ components.T
    x_rec_ref = z_ref @ components + mean[None, :]
    assert z.shape == (B, K) and x_rec.shape == (B, D)
    assert jnp.allclose(z, z_ref, atol=1e-3, rtol=1e-3)
    assert jnp.allclose(x_rec, x_rec_ref, atol=1e-3, rtol=1e-3)

    print("KERNEL_OK")
</pallas_src>

<mosaic_0001>
module attributes {stable_mosaic.version = 11 : i64} {
  func.func @_dimred_fwd_kernel(%arg0: i32, %arg1: i32, %arg2: memref<8x128xf32, #tpu.memory_space<vmem>>, %arg3: memref<128x128xf32, #tpu.memory_space<vmem>>, %arg4: memref<1x128xf32, #tpu.memory_space<vmem>>, %arg5: memref<8x128xf32, #tpu.memory_space<vmem>>, %arg6: memref<8x128xf32, #tpu.memory_space<vmem>>) attributes {dimension_semantics = [#tpu.dimension_semantics<parallel>, #tpu.dimension_semantics<arbitrary>], iteration_bounds = array<i64: 3, 2>, scalar_prefetch = 0 : i64, scratch_operands = 1 : i64, tpu.core_type = #tpu.core_type<tc>, window_params = [{transform_indices = @transform_0, window_bounds = array<i64: 8, 128>}, {transform_indices = @transform_1, window_bounds = array<i64: 128, 128>}, {pipeline_mode = #tpu.pipeline_mode<synchronous>, transform_indices = @transform_2, window_bounds = array<i64: 1, 128>}, {transform_indices = @transform_3, window_bounds = array<i64: 8, 128>}]} {
    %c0_i32 = arith.constant 0 : i32
    %0 = arith.cmpi eq, %arg1, %c0_i32 : i32
    %1 = arith.extui %0 : i1 to i32
    %c0_i32_0 = arith.constant 0 : i32
    %2 = arith.cmpi ne, %1, %c0_i32_0 : i32
    scf.if %2 {
      %cst_9 = arith.constant 0.000000e+00 : f32
      %12 = vector.broadcast %cst_9 : f32 to vector<8x128xf32>
      %c0_10 = arith.constant 0 : index
      %c0_11 = arith.constant 0 : index
      %13 = vector.load %arg6[%c0_10, %c0_11] : memref<8x128xf32, #tpu.memory_space<vmem>>, vector<8x128xf32>
      tpu.vector_store %arg6[%c0_10, %c0_11], %12 {strides = array<i32>} : memref<8x128xf32, #tpu.memory_space<vmem>>, vector<8x128xf32>,
    } else {
    }
    %c0 = arith.constant 0 : index
    %c0_1 = arith.constant 0 : index
    %3 = vector.load %arg6[%c0, %c0_1] : memref<8x128xf32, #tpu.memory_space<vmem>>, vector<8x128xf32>
    %c0_2 = arith.constant 0 : index
    %c0_3 = arith.constant 0 : index
    %4 = vector.load %arg2[%c0_2, %c0_3] : memref<8x128xf32, #tpu.memory_space<vmem>>, vector<8x128xf32>
    %c0_4 = arith.constant 0 : index
    %c0_5 = arith.constant 0 : index
    %5 = vector.load %arg3[%c0_4, %c0_5] : memref<128x128xf32, #tpu.memory_space<vmem>>, vector<128x128xf32>
    %cst = arith.constant dense<0.000000e+00> : vector<8x128xf32>
    %6 = tpu.matmul %4, %5, %cst {dimension_numbers = #tpu.dot_dimension_numbers<[1], [0], [0], [1], [0, 0, 1, 1], [], []>} : vector<8x128xf32>, vector<128x128xf32>, vector<8x128xf32> -> vector<8x128xf32>
    %7 = arith.addf %3, %6 : vector<8x128xf32>
    %c0_6 = arith.constant 0 : index
    %c0_7 = arith.constant 0 : index
    %8 = vector.load %arg6[%c0_6, %c0_7] : memref<8x128xf32, #tpu.memory_space<vmem>>, vector<8x128xf32>
    tpu.vector_store %arg6[%c0_6, %c0_7], %7 {strides = array<i32>} : memref<8x128xf32, #tpu.memory_space<vmem>>, vector<8x128xf32>,
    %c1_i32 = arith.constant 1 : i32
    %9 = arith.cmpi eq, %arg1, %c1_i32 : i32
    %10 = arith.extui %9 : i1 to i32
    %c0_i32_8 = arith.constant 0 : i32
    %11 = arith.cmpi ne, %10, %c0_i32_8 : i32
    scf.if %11 {
      %c0_9 = arith.constant 0 : index
      %c0_10 = arith.constant 0 : index
      %12 = vector.load %arg6[%c0_9, %c0_10] : memref<8x128xf32, #tpu.memory_space<vmem>>, vector<8x128xf32>
      %c0_11 = arith.constant 0 : index
      %c0_12 = arith.constant 0 : index
      %13 = vector.load %arg4[%c0_11, %c0_12] : memref<1x128xf32, #tpu.memory_space<vmem>>, vector<1x128xf32>
      %14 = vector.broadcast %13 : vector<1x128xf32> to vector<8x128xf32>
      %15 = arith.subf %12, %14 : vector<8x128xf32>
      %c0_13 = arith.constant 0 : index
      %c0_14 = arith.constant 0 : index
      %16 = vector.load %arg5[%c0_13, %c0_14] : memref<8x128xf32, #tpu.memory_space<vmem>>, vector<8x128xf32>
      tpu.vector_store %arg5[%c0_13, %c0_14], %15 {strides = array<i32>} : memref<8x128xf32, #tpu.memory_space<vmem>>, vector<8x128xf32>,
    } else {
    }
    return
  }
  func.func @transform_0(%arg0: i32, %arg1: i32) -> (i32, i32) {
    %c0_i32 = arith.constant 0 : i32
    return %arg0, %arg1 : i32, i32
  }
  func.func @transform_1(%arg0: i32, %arg1: i32) -> (i32, i32) {
    %c0_i32 = arith.constant 0 : i32
    %c0_i32_0 = arith.constant 0 : i32
    return %arg1, %c0_i32 : i32, i32
  }
  func.func @transform_2(%arg0: i32, %arg1: i32) -> (i32, i32) {
    %c0_i32 = arith.constant 0 : i32
    %c0_i32_0 = arith.constant 0 : i32
    %c0_i32_1 = arith.constant 0 : i32
    return %c0_i32, %c0_i32_0 : i32, i32
  }
  func.func @transform_3(%arg0: i32, %arg1: i32) -> (i32, i32) {
    %c0_i32 = arith.constant 0 : i32
    %c0_i32_0 = arith.constant 0 : i32
    return %arg0, %c0_i32 : i32, i32
  }
}

</mosaic_0001>

<llo_original>
// kernel: tpu_custom_call.1
$region0: #{tpu_custom_call.1}
  #allocation0 [shape = 'u32[]', space=smem, size = 0x4, offset = 0x4, fixed_abs, tag = 'smem constant byte address 0x4 - core index']
  #allocation1 [shape = 'u32[72,128]{1,0:T(1,128)}', space=vmem, size = 0x9000, scoped, tag = 'internal scratch']
  #allocation2 [shape = 'f32[8,128]{1,0:T(8,128)}', space=vmem, size = 0x1000, scoped, tag = 'scratch operand']
  %s0 = inlined_call_operand.hbm [shape: f32[24,256], index: 0, kind: input, shape index: {}]
  %s1 = inlined_call_operand.hbm [shape: f32[256,128], index: 1, kind: input, shape index: {}]
  %s2 = inlined_call_operand.vmem [shape: f32[1,128], index: 2, kind: input, shape index: {}]
  %s3 = inlined_call_operand.hbm [shape: f32[24,128], index: 3, kind: output, shape index: {}]
  %s4 = sld [smem:[#allocation0]]
  $region61: #{tpu_custom_call.1} parent=0
    _
  %s6 = ssub.s32 1, %s4
  %s7 = scalar_select 0, %s6, %s4
  $region1: #{tpu_custom_call.1} parent=0
    #allocation3 [shape = 'u8[8192]{0}', space=vmem, size = 0x2000, scoped, tag = 'input window, operand 0']
    #allocation4 [shape = 's32[2]{0}', space=sflag, size = 0x8, scoped, tag = 'scoped memory for tpu_custom_call.1']
    #allocation5 [shape = 's32[2]{0}', space=sflag, size = 0x8, scoped, tag = 'scoped memory for tpu_custom_call.1']
    #allocation6 [shape = 'u8[131072]{0}', space=vmem, size = 0x20000, scoped, tag = 'input window, operand 1']
    #allocation7 [shape = 's32[2]{0}', space=sflag, size = 0x8, scoped, tag = 'scoped memory for tpu_custom_call.1']
    #allocation8 [shape = 'u8[8192]{0}', space=vmem, size = 0x2000, scoped, tag = 'output window, operand 0']
    %8 = vsyncpa [#allocation4], 0
    %s9 = scalar_lea.sflag [#allocation4], 1
    %10 = vsyncpa %s9, 0
    %11 = vsyncpa [#allocation7], 0
    %s12 = scalar_lea.sflag [#allocation7], 1
    %13 = vsyncpa %s12, 0
    %14 = vsyncpa [#allocation5], 0
    %s15 = scalar_lea.sflag [#allocation5], 1
    %16 = vsyncpa %s15, 0
    loop: start=0, step=1, limit=8
    $region2: #{tpu_custom_call.1} parent=1 // loop_pre_header
      _
    $region3: #{tpu_custom_call.1} parent=1 // loop_header
      %s18 = sphi 0, %s22
      %p19 = scmp.ge.s32.totalorder %s18, 8
      %s25 = sphi 0, %s37
      %s26 = sphi 0, %s33
      %s27 = sphi 0, %s25
      %s28 = sphi 0, %s26
      %s29 = sphi 0, %s27
      %s30 = sphi 0, %s28
      %s42 = sphi 0, %s44
      %s45 = sphi 0, %s42
      %s46 = sphi 0, %s45
      %s62 = sphi 0, %s46
      %s68 = sphi 0, %s70
      %s71 = sphi 0, %s68
      %s72 = sphi 0, %s71
      %s88 = sphi 0, %s72
      %s92 = sphi 0, %s92
      %s94 = sphi 0, %s92
      %s95 = sphi 0, %s94
      %s109 = sphi 0, %s95
      %s115 = sphi 0, %s117
      %s118 = sphi 0, %s115
      %s119 = sphi 0, %s118
      %s135 = sphi 0, %s119
    $region4: #{tpu_custom_call.1} parent=1 // loop_header_branch
      %21 = sbr.rel (%p19) target = $region8
    $region5: #{tpu_custom_call.1} parent=1 // loop_body
      %s23 = ssub.s32 %s18, 1
      %s24 = ssub.s32 %s18, 2
      %s31 = sadd.s32 1, %s26
      %p32 = scmp.ge.s32.totalorder %s31, 2
      %s33 = scalar_select %p32, 0, %s31
      %s34 = sadd.s32 1, %s25
      %s35 = scalar_select %p32, %s34, %s25
      %p36 = scmp.ge.s32.totalorder %s35, 3
      %s37 = scalar_select %p36, 0, %s35
      %s38 = ssub.s32 %s25, %s37
      %s39 = ssub.s32 %s26, %s33
      %s40 = sor.u32 %s38, %s39
      %p41 = scmp.eq.s32.totalorder %s40, 0
      %s43 = sadd.s32 %s42, 1
      %s44 = scalar_select %p41, %s42, %s43
      %p47 = pneg %p41
      %p48 = scmp.eq.s32.totalorder %s18, 5
      %p49 = por %p47, %p48
      %p50 = scmp.ne.s32.totalorder %s42, %s45
      %p51 = scmp.eq.s32.totalorder %s18, 0
      %p52 = por %p50, %p51
      %p53 = scmp.ne.s32.totalorder %s42, %s45
      %p54 = scmp.eq.s32.totalorder %s23, 5
      %p55 = por %p53, %p54
      %p56 = scmp.ne.s32.totalorder %s45, %s46
      %p57 = scmp.eq.s32.totalorder %s23, 0
      %p58 = por %p56, %p57
      %p59 = scmp.ne.s32.totalorder %s45, %s46
      %p60 = scmp.eq.s32.totalorder %s24, 5
      %p61 = por %p59, %p60
      %p63 = scmp.ne.s32.totalorder %s46, %s62
      %p64 = scmp.eq.s32.totalorder %s24, 0
      %p65 = por %p63, %p64
      %s66 = ssub.s32 %s26, %s33
      %p67 = scmp.eq.s32.totalorder %s66, 0
      %s69 = sadd.s32 %s68, 1
      %s70 = scalar_select %p67, %s68, %s69
      %p73 = pneg %p67
      %p74 = scmp.eq.s32.totalorder %s18, 5
      %p75 = por %p73, %p74
      %p76 = scmp.ne.s32.totalorder %s68, %s71
      %p77 = scmp.eq.s32.totalorder %s18, 0
      %p78 = por %p76, %p77
      %p79 = scmp.ne.s32.totalorder %s68, %s71
      %p80 = scmp.eq.s32.totalorder %s23, 5
      %p81 = por %p79, %p80
      %p82 = scmp.ne.s32.totalorder %s71, %s72
      %p83 = scmp.eq.s32.totalorder %s23, 0
      %p84 = por %p82, %p83
      %p85 = scmp.ne.s32.totalorder %s71, %s72
      %p86 = scmp.eq.s32.totalorder %s24, 5
      %p87 = por %p85, %p86
      %p89 = scmp.ne.s32.totalorder %s72, %s88
      %p90 = scmp.eq.s32.totalorder %s24, 0
      %p91 = por %p89, %p90
      %s93 = sadd.s32 %s92, 1
      %p96 = scmp.eq.s32.totalorder %s18, 5
      %p97 = scmp.ne.s32.totalorder %s92, %s94
      %p98 = scmp.eq.s32.totalorder %s18, 0
      %p99 = por %p97, %p98
      %p100 = scmp.ne.s32.totalorder %s92, %s94
      %p101 = scmp.eq.s32.totalorder %s23, 5
      %p102 = por %p100, %p101
      %p103 = scmp.ne.s32.totalorder %s94, %s95
      %p104 = scmp.eq.s32.totalorder %s23, 0
      %p105 = por %p103, %p104
      %p106 = scmp.ne.s32.totalorder %s94, %s95
      %p107 = scmp.eq.s32.totalorder %s24, 5
      %p108 = por %p106, %p107
      %p110 = scmp.ne.s32.totalorder %s95, %s109
      %p111 = scmp.eq.s32.totalorder %s24, 0
      %p112 = por %p110, %p111
      %s113 = ssub.s32 %s25, %s37
      %p114 = scmp.eq.s32.totalorder %s113, 0
      %s116 = sadd.s32 %s115, 1
      %s117 = scalar_select %p114, %s115, %s116
      %p120 = pneg %p114
      %p121 = scmp.eq.s32.totalorder %s18, 5
      %p122 = por %p120, %p121
      %p123 = scmp.ne.s32.totalorder %s115, %s118
      %p124 = scmp.eq.s32.totalorder %s18, 0
      %p125 = por %p123, %p124
      %p126 = scmp.ne.s32.totalorder %s115, %s118
      %p127 = scmp.eq.s32.totalorder %s23, 5
      %p128 = por %p126, %p127
      %p129 = scmp.ne.s32.totalorder %s118, %s119
      %p130 = scmp.eq.s32.totalorder %s23, 0
      %p131 = por %p129, %p130
      %p132 = scmp.ne.s32.totalorder %s118, %s119
      %p133 = scmp.eq.s32.totalorder %s24, 5
      %p134 = por %p132, %p133
      %p136 = scmp.ne.s32.totalorder %s119, %s135
      %p137 = scmp.eq.s32.totalorder %s24, 0
      %p138 = por %p136, %p137
      %p139 = scmp.le.s32.totalorder 1, %s18
      %p140 = scmp.lt.s32.totalorder %s18, 7
      %p141 = pnand %p139, %p140
      %p142 = pneg %p141
      // Predicated region
      $region9: #{tpu_custom_call.1} parent=5 // pred_check
        _
      $region10: #{tpu_custom_call.1} parent=5 // pred_check_branch
        %144 = sbr.rel (%p141) target = $region12
      $region11: #{tpu_custom_call.1} parent=5 // pred_region
        %s145 = ssub.s32 %s18, 1
        // Predicated region
        $region13: #{tpu_custom_call.1} parent=11 // pred_check
          %p146 = pneg %p105
        $region14: #{tpu_custom_call.1} parent=11 // pred_check_branch
          %148 = sbr.rel (%p146) target = $region16
        $region15: #{tpu_custom_call.1} parent=11 // pred_region
          _
        $region16: #{tpu_custom_call.1} parent=11 // pred_fallthru
          _
      $region12: #{tpu_custom_call.1} parent=5 // pred_fallthru
        _
      %p149 = scmp.lt.s32.totalorder %s18, 6
      // Predicated region
      $region17: #{tpu_custom_call.1} parent=5 // pred_check
        %p150 = pneg %p149
      $region18: #{tpu_custom_call.1} parent=5 // pred_check_branch
        %152 = sbr.rel (%p150) target = $region20
      $region19: #{tpu_custom_call.1} parent=5 // pred_region
        // Predicated region
        $region21: #{tpu_custom_call.1} parent=19 // pred_check
          %p153 = pneg %p52
        $region22: #{tpu_custom_call.1} parent=19 // pred_check_branch
          %155 = sbr.rel (%p153) target = $region24
        $region23: #{tpu_custom_call.1} parent=19 // pred_region
          %s156 = sand.u32 %s42, 1
          %s157 = scalar_lea.sflag [#allocation4], %s156
          %s158 = sand.u32 %s42, 1
          %s159 = smul.addr %s158, 8
          %s160 = scalar_lea.vmem [#allocation3], %s159
          %162 = vsyncadd %s157, 0
          %s163 = smul.addr %s25, 2
          %s164 = sadd.s32 %s26, %s163
          %s165 = smul.addr %s164, 8
          %s166 = scalar_lea.hbm %s0, %s165
          %s168 = sshll.u32 %s166, 4
          %s169 = int_to_ptr.hbm [resolvable:$true] %s168
          %s170 = sshll.u32 %s160, 4
          %s171 = int_to_ptr.vmem [resolvable:$true] %s170
          %173 = dma.hbm_to_vmem [thread:$0]  %s169, 128, %s171, %s157
        $region24: #{tpu_custom_call.1} parent=19 // pred_fallthru
          _
        // Predicated region
        $region25: #{tpu_custom_call.1} parent=19 // pred_check
          %p174 = pneg %p78
        $region26: #{tpu_custom_call.1} parent=19 // pred_check_branch
          %176 = sbr.rel (%p174) target = $region28
        $region27: #{tpu_custom_call.1} parent=19 // pred_region
          %s177 = sand.u32 %s68, 1
          %s178 = scalar_lea.sflag [#allocation7], %s177
          %s179 = sand.u32 %s68, 1
          %s180 = smul.addr %s179, 128
          %s181 = scalar_lea.vmem [#allocation6], %s180
          %s182 = smul.u32 16, %s26
          %184 = vsyncadd %s178, 0
          %s185 = smul.addr %s182, 8
          %s186 = scalar_lea.hbm %s1, %s185
          %s187 = sshll.u32 %s186, 4
          %s188 = int_to_ptr.hbm [resolvable:$true] %s187
          %s189 = sshll.u32 %s181, 4
          %s190 = int_to_ptr.vmem [resolvable:$true] %s189
          %195 = dma.hbm_to_vmem [thread:$0]  %s188, 2048, %s190, %s178, 128, 128, 8
        $region28: #{tpu_custom_call.1} parent=19 // pred_fallthru
          _
      $region20: #{tpu_custom_call.1} parent=5 // pred_fallthru
        _
      %p196 = scmp.le.s32.totalorder 1, %s18
      %p197 = scmp.lt.s32.totalorder %s18, 7
      %p198 = pnand %p196, %p197
      %p199 = pneg %p198
      // Predicated region
      $region29: #{tpu_custom_call.1} parent=5 // pred_check
        _
      $region30: #{tpu_custom_call.1} parent=5 // pred_check_branch
        %201 = sbr.rel (%p198) target = $region32
      $region31: #{tpu_custom_call.1} parent=5 // pred_region
        %s202 = ssub.s32 %s18, 1
        %s203 = sand.u32 %s45, 1
        %s204 = scalar_lea.sflag [#allocation4], %s203
        %s205 = sand.u32 %s45, 1
        %s206 = smul.addr %s205, 8
        %s207 = scalar_lea.vmem [#allocation3], %s206
        // Predicated region
        $region33: #{tpu_custom_call.1} parent=31 // pred_check
          %p208 = pneg %p58
        $region34: #{tpu_custom_call.1} parent=31 // pred_check_branch
          %210 = sbr.rel (%p208) target = $region36
        $region35: #{tpu_custom_call.1} parent=31 // pred_region
          %212 = dma.done %s204, 128
        $region36: #{tpu_custom_call.1} parent=31 // pred_fallthru
          _
        %s213 = sand.u32 %s71, 1
        %s214 = scalar_lea.sflag [#allocation7], %s213
        %s215 = sand.u32 %s71, 1
        %s216 = smul.addr %s215, 128
        %s217 = scalar_lea.vmem [#allocation6], %s216
        // Predicated region
        $region37: #{tpu_custom_call.1} parent=31 // pred_check
          %p218 = pneg %p84
        $region38: #{tpu_custom_call.1} parent=31 // pred_check_branch
          %220 = sbr.rel (%p218) target = $region40
        $region39: #{tpu_custom_call.1} parent=31 // pred_region
          %222 = dma.done %s214, 2048
        $region40: #{tpu_custom_call.1} parent=31 // pred_fallthru
          _
        %s223 = sand.u32 %s45, 1
        %s224 = scalar_lea.sflag [#allocation4], %s223
        %s225 = sand.u32 %s45, 1
        %s226 = smul.addr %s225, 8
        %s227 = scalar_lea.vmem [#allocation3], %s226
        %p228 = pneg %p58
        %p229 = pneg %p55
        %s230 = sand.u32 %s71, 1
        %s231 = scalar_lea.sflag [#allocation7], %s230
        %s232 = sand.u32 %s71, 1
        %s233 = smul.addr %s232, 128
        %s234 = scalar_lea.vmem [#allocation6], %s233
        %p235 = pneg %p84
        %p236 = pneg %p81
        %p237 = pneg %p105
        %p238 = pneg %p102
        %p239 = pneg %p131
        %p240 = pneg %p128
        %s241 = sand.u32 %s118, 1
        %s242 = scalar_lea.sflag [#allocation5], %s241
        %s243 = sand.u32 %s118, 1
        %s244 = smul.addr %s243, 8
        %s245 = scalar_lea.vmem [#allocation8], %s244
        %s246 = smul.u32 16, %s28
        %p247 = scmp.eq.s32.totalorder %s28, 0
        // Predicated region
        $region41: #{tpu_custom_call.1} parent=31 // pred_check
          %p248 = pneg %p247
        $region42: #{tpu_custom_call.1} parent=31 // pred_check_branch
          %250 = sbr.rel (%p248) target = $region44
        $region43: #{tpu_custom_call.1} parent=31 // pred_region
          %251 = vst [vmem:[#allocation2] sm:$0xff] 0.0
        $region44: #{tpu_custom_call.1} parent=31 // pred_fallthru
          _
        %v252 = vld [vmem:[#allocation2] sm:$0xff]
        %v253 = vld [vmem:[%s207] sm:$0xff]
        %v254 = vld [vmem:[%s217] sm:$0xff]
        %v255 = vld [vmem:[%s217 + $0x8] sm:$0xff]
        %v256 = vld [vmem:[%s217 + $0x10] sm:$0xff]
        %v257 = vld [vmem:[%s217 + $0x18] sm:$0xff]
        %v258 = vld [vmem:[%s217 + $0x20] sm:$0xff]
        %v259 = vld [vmem:[%s217 + $0x28] sm:$0xff]
        %v260 = vld [vmem:[%s217 + $0x30] sm:$0xff]
        %v261 = vld [vmem:[%s217 + $0x38] sm:$0xff]
        %v262 = vld [vmem:[%s217 + $0x40] sm:$0xff]
        %v263 = vld [vmem:[%s217 + $0x48] sm:$0xff]
        %v264 = vld [vmem:[%s217 + $0x50] sm:$0xff]
        %v265 = vld [vmem:[%s217 + $0x58] sm:$0xff]
        %v266 = vld [vmem:[%s217 + $0x60] sm:$0xff]
        %v267 = vld [vmem:[%s217 + $0x68] sm:$0xff]
        %v268 = vld [vmem:[%s217 + $0x70] sm:$0xff]
        %v269 = vld [vmem:[%s217 + $0x78] sm:$0xff]
        %270 = vmatpush.msra.mxu0 %v269
        %271 = vmatpush.msra.mxu0 %v268
        %272 = vmatpush.msra.mxu0 %v267
        %273 = vmatpush.msra.mxu0 %v266
        %274 = vmatpush.msra.mxu0 %v265
        %275 = vmatpush.msra.mxu0 %v264
        %276 = vmatpush.msra.mxu0 %v263
        %277 = vmatpush.msra.mxu0 %v262
        %278 = vmatpush.msra.mxu0 %v261
        %279 = vmatpush.msra.mxu0 %v260
        %280 = vmatpush.msra.mxu0 %v259
        %281 = vmatpush.msra.mxu0 %v258
        %282 = vmatpush.msra.mxu0 %v257
        %283 = vmatpush.msra.mxu0 %v256
        %284 = vmatpush.msra.mxu0 %v255
        %285 = vmatpush.msra.mxu0 %v254
        %286 = vmatmul.f32.gmra.mxu0 %v253
        %v287 = vpop.f32.mrf.mxu0
        %v288 = vadd.f32 0.0, %v287
        %289 = vdwg.mxu0
        %v290 = vadd.f32 %v252, %v288
        %291 = vst [vmem:[#allocation2] sm:$0xff] %v290
        %p292 = scmp.eq.s32.totalorder %s28, 1
        // Predicated region
        $region45: #{tpu_custom_call.1} parent=31 // pred_check
          %p293 = pneg %p292
        $region46: #{tpu_custom_call.1} parent=31 // pred_check_branch
          %295 = sbr.rel (%p293) target = $region48
        $region47: #{tpu_custom_call.1} parent=31 // pred_region
          %v296 = vld [vmem:[#allocation2] sm:$0xff]
          %v297 = vld [vmem:[%s2] sm:$0x1]
          %v299 = vperm.slane %v297, 0
          %v301 = vsub.f32 %v296, %v299
          %302 = vst [vmem:[%s245] sm:$0xff] %v301
        $region48: #{tpu_custom_call.1} parent=31 // pred_fallthru
          _
        %s303 = sand.u32 %s118, 1
        %s304 = scalar_lea.sflag [#allocation5], %s303
        %s305 = sand.u32 %s118, 1
        %s306 = smul.addr %s305, 8
        %s307 = scalar_lea.vmem [#allocation8], %s306
        // Predicated region
        $region49: #{tpu_custom_call.1} parent=31 // pred_check
          %p308 = pneg %p128
        $region50: #{tpu_custom_call.1} parent=31 // pred_check_branch
          %310 = sbr.rel (%p308) target = $region52
        $region51: #{tpu_custom_call.1} parent=31 // pred_region
          %312 = vsyncadd %s304, 0
          %s313 = smul.addr %s27, 8
          %s314 = scalar_lea.hbm %s3, %s313
          %s316 = sshll.u32 %s307, 4
          %s317 = int_to_ptr.vmem [resolvable:$true] %s316
          %s318 = sshll.u32 %s314, 4
          %s319 = int_to_ptr.hbm [resolvable:$true] %s318
          %321 = dma.vmem_to_hbm [thread:$0]  %s317, 128, %s319, %s304
        $region52: #{tpu_custom_call.1} parent=31 // pred_fallthru
          _
      $region32: #{tpu_custom_call.1} parent=5 // pred_fallthru
        _
      %p322 = scmp.le.s32.totalorder 2, %s18
      // Predicated region
      $region53: #{tpu_custom_call.1} parent=5 // pred_check
        %p323 = pneg %p322
      $region54: #{tpu_custom_call.1} parent=5 // pred_check_branch
        %325 = sbr.rel (%p323) target = $region56
      $region55: #{tpu_custom_call.1} parent=5 // pred_region
        %s326 = ssub.s32 %s18, 2
        // Predicated region
        $region57: #{tpu_custom_call.1} parent=55 // pred_check
          %p327 = pneg %p134
        $region58: #{tpu_custom_call.1} parent=55 // pred_check_branch
          %329 = sbr.rel (%p327) target = $region60
        $region59: #{tpu_custom_call.1} parent=55 // pred_region
          %s330 = sand.u32 %s119, 1
          %s331 = scalar_lea.sflag [#allocation5], %s330
          %s332 = sand.u32 %s119, 1
          %s333 = smul.addr %s332, 8
          %s334 = scalar_lea.vmem [#allocation8], %s333
          %336 = dma.done %s331, 128
        $region60: #{tpu_custom_call.1} parent=55 // pred_fallthru
          _
      $region56: #{tpu_custom_call.1} parent=5 // pred_fallthru
        _
    $region6: #{tpu_custom_call.1} parent=1 // loop_footer
      %s22 = sadd.s32 1, %s18
    $region7: #{tpu_custom_call.1} parent=1 // loop_footer_branch
      %17 = sbr.rel target = $region3
    $region8: #{tpu_custom_call.1} parent=1 // loop_exit
      _
    %337 = vsyncpa [#allocation4], 1
    %s338 = scalar_lea.sflag [#allocation4], 1
    %339 = vsyncpa %s338, 1
    %340 = vsyncpa [#allocation7], 1
    %s341 = scalar_lea.sflag [#allocation7], 1
    %342 = vsyncpa %s341, 1
    %343 = vsyncpa [#allocation5], 1
    %s344 = scalar_lea.sflag [#allocation5], 1
    %345 = vsyncpa %s344, 1

</llo_original>
